<compile_context>
chip_gen: v5e
topology: v5e:2x2
jax: 0.10.0
libtpu: 0.0.40
codegen_flags: <defaults>
</compile_context>

<pallas_src>
import jax
import jax.numpy as jnp
from jax import lax
from jax.experimental import pallas as pl
from jax.experimental.pallas import tpu as pltpu

N = 256          # number of points (small test size)
C = 64           # backbone_out_channels
ROWS = 8         # sublane-padded row count for transposed / packed blocks
EPS_BN = 1e-3    # BatchNorm1d eps from the module
INSTANCE_IGNORE = -1
_EPS_SQ = 1e-16  # squared-norm eps ~ (1e-8)^2 of torch's (norm + 1e-8) form


# ---------------------------------------------------------------------------
# Fused kernel: bias_head (Linear -> BN -> ReLU -> Linear) + masked losses
# ---------------------------------------------------------------------------
def _fused_kernel(feat_ref, w1_ref, w2t_ref, prm_ref, b2_ref, geo_ref,
                  bias_out_ref, loss_ref):
    n = feat_ref.shape[0]
    b1 = prm_ref[0:1, :]                                              # (1, C)
    gamma = prm_ref[1:2, :]
    beta = prm_ref[2:3, :]

    # ---- Linear1: bf16 MXU operands, f32 accumulation -----------------------
    h = jnp.dot(feat_ref[...], w1_ref[...],
                preferred_element_type=jnp.float32) + b1              # (N, C) f32

    # ---- BatchNorm1d (training-mode batch stats) on the MXU -----------------
    # sum / sum-of-squares via ones @ h, ones @ (h*h); folded single affine.
    ones8 = jnp.ones((ROWS, n), jnp.float32)       # sublane-tile M; rows 1..7 free
    dn = (((1,), (0,)), ((), ()))
    s1 = lax.dot_general(ones8, h, dn, preferred_element_type=jnp.float32)[0:1, :]
    s2 = lax.dot_general(ones8, h * h, dn, preferred_element_type=jnp.float32)[0:1, :]
    inv_n = 1.0 / n
    mean = s1 * inv_n                                                  # (1, C)
    var = s2 * inv_n - mean * mean                                     # (1, C)
    scale = gamma * lax.rsqrt(var + EPS_BN)                            # (1, C)
    shift = beta - mean * scale                                        # (1, C)
    h = jnp.maximum(h * scale + shift, 0.0)                            # BN + ReLU

    # ---- Linear2, produced lane-dense as bias^T (rows 3..7 exactly zero) ----
    # (ROWS, N) = (ROWS, C) @ (N, C)^T with bf16 operands, f32 accumulate.
    bias_t = lax.dot_general(
        w2t_ref[...], h.astype(jnp.bfloat16),
        dimension_numbers=(((1,), (1,)), ((), ())),
        preferred_element_type=jnp.float32) + b2_ref[...]              # (ROWS, N)
    bias_out_ref[...] = bias_t

    # ---- loss ----------------------------------------------------------------
    bx, by, bz = bias_t[0:1, :], bias_t[1:2, :], bias_t[2:3, :]        # (1, N)
    gx = geo_ref[3:4, :] - geo_ref[0:1, :]        # bias_gt = centroid - coord
    gy = geo_ref[4:5, :] - geo_ref[1:2, :]
    gz = geo_ref[5:6, :] - geo_ref[2:3, :]
    mask = geo_ref[6:7, :]                                             # (1, N) f32
    inv_msum = 1.0 / (jnp.sum(mask) + 1e-8)

    # masked L1 over the first two (x, y) components only
    l1 = jnp.sum((jnp.abs(bx - gx) + jnp.abs(by - gy)) * mask) * inv_msum

    # masked cosine loss over the full 3-vector (exact rsqrt on the EUP)
    p2 = bx * bx + by * by + bz * bz
    g2 = gx * gx + gy * gy + gz * gz
    dot_pg = bx * gx + by * gy + bz * gz
    cos = -dot_pg * lax.rsqrt(p2 + _EPS_SQ) * lax.rsqrt(g2 + _EPS_SQ)
    closs = jnp.sum(cos * mask) * inv_msum

    loss_ref[0] = l1 + closs
    loss_ref[1] = l1
    loss_ref[2] = closs


# ---------------------------------------------------------------------------
# One-time parameter preparation (padding / packing / bf16 cast hoisted out)
# ---------------------------------------------------------------------------
def prepare_params(w1, b1, gamma, beta, w2, b2):
    c = w1.shape[0]
    w2t = jnp.zeros((ROWS, c), jnp.float32).at[:3, :].set(w2.T)
    params = (jnp.zeros((ROWS, c), jnp.float32)
              .at[0, :].set(b1).at[1, :].set(gamma).at[2, :].set(beta))
    b2col = jnp.zeros((ROWS, 1), jnp.float32).at[:3, 0].set(b2)
    return dict(
        w1=w1.astype(jnp.bfloat16),       # bf16 MXU operand (f32 accumulate)
        w2t=w2t.astype(jnp.bfloat16),
        params=params,                    # rows: b1 / gamma / beta / zeros
        b2col=b2col,
    )


# ---------------------------------------------------------------------------
# Forward (training path of PointGroup.forward)
# ---------------------------------------------------------------------------
def point_group_forward(prepped, data_dict):
    # TODO(synk): the sparse-conv backbone is an external registered model; the
    # backbone output feature `feat` is taken directly as an input here.
    feat = data_dict["feat"]
    n, c = feat.shape
    feat_bf16 = feat.astype(jnp.bfloat16)   # halve the dominant input DMA

    # Packed lane-dense geometry block: rows 0-2 coord^T, 3-5 centroid^T,
    # 6 float mask, 7 zero  -> one DMA instead of three.
    coord_t = data_dict["coord"].astype(jnp.float32).T                 # (3, N)
    centroid_t = data_dict["instance_centroid"].astype(jnp.float32).T  # (3, N)
    mask = (data_dict["instance"] != INSTANCE_IGNORE).astype(jnp.float32)
    geo = jnp.concatenate(
        [coord_t, centroid_t, mask[None, :], jnp.zeros((1, n), jnp.float32)],
        axis=0)                                                        # (8, N)

    bias_t, losses = pl.pallas_call(
        _fused_kernel,
        out_shape=(jax.ShapeDtypeStruct((ROWS, n), jnp.float32),
                   jax.ShapeDtypeStruct((3,), jnp.float32)),
        grid=(1,),
        in_specs=[
            pl.BlockSpec((n, c), lambda i: (0, 0)),        # feat (bf16)
            pl.BlockSpec((c, c), lambda i: (0, 0)),        # w1 (bf16)
            pl.BlockSpec((ROWS, c), lambda i: (0, 0)),     # w2^T padded (bf16)
            pl.BlockSpec((ROWS, c), lambda i: (0, 0)),     # b1/gamma/beta block
            pl.BlockSpec((ROWS, 1), lambda i: (0, 0)),     # b2 column (padded)
            pl.BlockSpec((ROWS, n), lambda i: (0, 0)),     # geo block
        ],
        out_specs=(pl.BlockSpec((ROWS, n), lambda i: (0, 0)),
                   pl.BlockSpec(memory_space=pltpu.MemorySpace.SMEM)),
        compiler_params=pltpu.CompilerParams(
            dimension_semantics=("arbitrary",)),
    )(feat_bf16, prepped["w1"], prepped["w2t"], prepped["params"],
      prepped["b2col"], geo)

    # TODO(synk): pred_feat / pred_feat_m (ball-query / KDTree clustering with
    # data-dependent sequential loops) have no clean Pallas equivalent;
    # training branch only.
    return dict(loss=losses[0], bias_l1_loss=losses[1],
                bias_cosine_loss=losses[2],
                bias_pred=bias_t[:3, :].T)   # rows 3..7 are zero padding


# ---------------------------------------------------------------------------
# Pure-JAX reference. matmul_dtype=f32 -> exact module semantics;
# matmul_dtype=bf16 -> same MXU-operand precision as the kernel.
# ---------------------------------------------------------------------------
def reference_forward(raw_params, data_dict, matmul_dtype=jnp.float32):
    feat = data_dict["feat"].astype(matmul_dtype)
    w1 = raw_params["w1"].astype(matmul_dtype)
    h = jnp.dot(feat, w1, preferred_element_type=jnp.float32) + raw_params["b1"]
    mean = jnp.mean(h, axis=0, keepdims=True)
    var = jnp.mean((h - mean) ** 2, axis=0, keepdims=True)
    h = (h - mean) / jnp.sqrt(var + EPS_BN) * raw_params["gamma"] + raw_params["beta"]
    h = jnp.maximum(h, 0.0)
    bias_pred = jnp.dot(h.astype(matmul_dtype),
                        raw_params["w2"].astype(matmul_dtype),
                        preferred_element_type=jnp.float32) + raw_params["b2"]

    coord = data_dict["coord"]
    centroid = data_dict["instance_centroid"]
    instance = data_dict["instance"]
    mask = (instance != INSTANCE_IGNORE).astype(jnp.float32)
    bias_gt = centroid - coord
    bias_dist = jnp.sum(jnp.abs(bias_pred[:, :2] - bias_gt[:, :2]), axis=-1)
    l1 = jnp.sum(bias_dist * mask) / (jnp.sum(mask) + 1e-8)
    pn = bias_pred / (jnp.linalg.norm(bias_pred, axis=1, keepdims=True) + 1e-8)
    gn = bias_gt / (jnp.linalg.norm(bias_gt, axis=1, keepdims=True) + 1e-8)
    cos = -jnp.sum(pn * gn, axis=-1)
    closs = jnp.sum(cos * mask) / (jnp.sum(mask) + 1e-8)
    return dict(loss=l1 + closs, bias_l1_loss=l1, bias_cosine_loss=closs,
                bias_pred=bias_pred)


if __name__ == "__main__":
    key = jax.random.PRNGKey(0)
    k = jax.random.split(key, 8)

    raw_params = dict(
        w1=jax.random.normal(k[0], (C, C), jnp.float32) * 0.1,
        b1=jax.random.normal(k[1], (C,), jnp.float32) * 0.1,
        gamma=jnp.ones((C,), jnp.float32),
        beta=jnp.zeros((C,), jnp.float32),
        w2=jax.random.normal(k[2], (C, 3), jnp.float32) * 0.1,
        b2=jax.random.normal(k[3], (3,), jnp.float32) * 0.1,
    )
    prepped = prepare_params(**raw_params)   # one-time padding / packing / casts

    data_dict = dict(
        feat=jax.random.normal(k[4], (N, C), jnp.float32),
        coord=jax.random.normal(k[5], (N, 3), jnp.float32),
        instance_centroid=jax.random.normal(k[6], (N, 3), jnp.float32),
        instance=jnp.where(jax.random.uniform(k[7], (N,)) < 0.2,
                           jnp.int32(-1),
                           jnp.arange(N, dtype=jnp.int32) % 7),
    )

    out = point_group_forward(prepped, data_dict)
    out = jax.tree_util.tree_map(jax.block_until_ready, out)

    # Tight check vs. a reference using the same bf16 MXU-operand precision
    # (validates the kernel itself).
    ref_m = reference_forward(raw_params, data_dict, matmul_dtype=jnp.bfloat16)
    assert jnp.allclose(out["bias_pred"], ref_m["bias_pred"], rtol=1e-3, atol=1e-3)
    for name in ("loss", "bias_l1_loss", "bias_cosine_loss"):
        assert jnp.allclose(out[name], ref_m[name], rtol=1e-3, atol=1e-3), name

    # Loose sanity check vs. pure-f32 module semantics (bounds the bf16-operand
    # rounding introduced for MXU/DMA performance).
    ref_f = reference_forward(raw_params, data_dict, matmul_dtype=jnp.float32)
    assert jnp.allclose(out["bias_pred"], ref_f["bias_pred"], rtol=5e-2, atol=5e-2)
    for name in ("loss", "bias_l1_loss", "bias_cosine_loss"):
        assert jnp.allclose(out[name], ref_f[name], rtol=5e-2, atol=5e-2), name

    print("KERNEL_OK")
</pallas_src>

<mosaic_0001>
module attributes {stable_mosaic.version = 11 : i64} {
  func.func @_fused_kernel(%arg0: i32, %arg1: memref<256x64xbf16, #tpu.memory_space<vmem>>, %arg2: memref<64x64xbf16, #tpu.memory_space<vmem>>, %arg3: memref<8x64xbf16, #tpu.memory_space<vmem>>, %arg4: memref<8x64xf32, #tpu.memory_space<vmem>>, %arg5: memref<8x1xf32, #tpu.memory_space<vmem>>, %arg6: memref<8x256xf32, #tpu.memory_space<vmem>>, %arg7: memref<8x256xf32, #tpu.memory_space<vmem>>, %arg8: memref<3xf32, #tpu.memory_space<smem>>) attributes {dimension_semantics = [#tpu.dimension_semantics<arbitrary>], iteration_bounds = array<i64: 1>, scalar_prefetch = 0 : i64, scratch_operands = 0 : i64, tpu.core_type = #tpu.core_type<tc>, window_params = [{pipeline_mode = #tpu.pipeline_mode<synchronous>, transform_indices = @transform_0, window_bounds = array<i64: 256, 64>}, {pipeline_mode = #tpu.pipeline_mode<synchronous>, transform_indices = @transform_1, window_bounds = array<i64: 64, 64>}, {pipeline_mode = #tpu.pipeline_mode<synchronous>, transform_indices = @transform_2, window_bounds = array<i64: 8, 64>}, {pipeline_mode = #tpu.pipeline_mode<synchronous>, transform_indices = @transform_3, window_bounds = array<i64: 8, 64>}, {pipeline_mode = #tpu.pipeline_mode<synchronous>, transform_indices = @transform_4, window_bounds = array<i64: 8, 1>}, {pipeline_mode = #tpu.pipeline_mode<synchronous>, transform_indices = @transform_5, window_bounds = array<i64: 8, 256>}, {pipeline_mode = #tpu.pipeline_mode<synchronous>, transform_indices = @transform_6, window_bounds = array<i64: 8, 256>}, {transform_indices = @transform_7, window_bounds = array<i64: 3>}]} {
    %c0 = arith.constant 0 : index
    %c0_0 = arith.constant 0 : index
    %0 = vector.load %arg4[%c0, %c0_0] : memref<8x64xf32, #tpu.memory_space<vmem>>, vector<1x64xf32>
    %c1 = arith.constant 1 : index
    %c0_1 = arith.constant 0 : index
    %1 = vector.load %arg4[%c1, %c0_1] : memref<8x64xf32, #tpu.memory_space<vmem>>, vector<1x64xf32>
    %c2 = arith.constant 2 : index
    %c0_2 = arith.constant 0 : index
    %2 = vector.load %arg4[%c2, %c0_2] : memref<8x64xf32, #tpu.memory_space<vmem>>, vector<1x64xf32>
    %c0_3 = arith.constant 0 : index
    %c0_4 = arith.constant 0 : index
    %3 = vector.load %arg1[%c0_3, %c0_4] : memref<256x64xbf16, #tpu.memory_space<vmem>>, vector<256x64xbf16>
    %c0_5 = arith.constant 0 : index
    %c0_6 = arith.constant 0 : index
    %4 = vector.load %arg2[%c0_5, %c0_6] : memref<64x64xbf16, #tpu.memory_space<vmem>>, vector<64x64xbf16>
    %cst = arith.constant dense<0.000000e+00> : vector<256x64xf32>
    %5 = tpu.matmul %3, %4, %cst {dimension_numbers = #tpu.dot_dimension_numbers<[1], [0], [0], [1], [0, 0, 1, 1], [], []>} : vector<256x64xbf16>, vector<64x64xbf16>, vector<256x64xf32> -> vector<256x64xf32>
    %6 = vector.broadcast %0 : vector<1x64xf32> to vector<256x64xf32>
    %7 = arith.addf %5, %6 : vector<256x64xf32>
    %cst_7 = arith.constant 1.000000e+00 : f32
    %8 = vector.broadcast %cst_7 : f32 to vector<8x256xf32>
    %cst_8 = arith.constant dense<0.000000e+00> : vector<8x64xf32>
    %9 = tpu.matmul %8, %7, %cst_8 {dimension_numbers = #tpu.dot_dimension_numbers<[1], [0], [0], [1], [0, 0, 1, 1], [], []>} : vector<8x256xf32>, vector<256x64xf32>, vector<8x64xf32> -> vector<8x64xf32>
    %10 = vector.extract_strided_slice %9 {offsets = [0, 0], sizes = [1, 64], strides = [1, 1]} : vector<8x64xf32> to vector<1x64xf32>
    %11 = arith.mulf %7, %7 : vector<256x64xf32>
    %cst_9 = arith.constant dense<0.000000e+00> : vector<8x64xf32>
    %12 = tpu.matmul %8, %11, %cst_9 {dimension_numbers = #tpu.dot_dimension_numbers<[1], [0], [0], [1], [0, 0, 1, 1], [], []>} : vector<8x256xf32>, vector<256x64xf32>, vector<8x64xf32> -> vector<8x64xf32>
    %13 = vector.extract_strided_slice %12 {offsets = [0, 0], sizes = [1, 64], strides = [1, 1]} : vector<8x64xf32> to vector<1x64xf32>
    %cst_10 = arith.constant 3.906250e-03 : f32
    %14 = vector.broadcast %cst_10 : f32 to vector<1x64xf32>
    %15 = arith.mulf %10, %14 : vector<1x64xf32>
    %cst_11 = arith.constant 3.906250e-03 : f32
    %16 = vector.broadcast %cst_11 : f32 to vector<1x64xf32>
    %17 = arith.mulf %13, %16 : vector<1x64xf32>
    %18 = arith.mulf %15, %15 : vector<1x64xf32>
    %19 = arith.subf %17, %18 : vector<1x64xf32>
    %cst_12 = arith.constant 1.000000e-03 : f32
    %20 = vector.broadcast %cst_12 : f32 to vector<1x64xf32>
    %21 = arith.addf %19, %20 : vector<1x64xf32>
    %22 = math.rsqrt %21 : vector<1x64xf32>
    %23 = arith.mulf %1, %22 : vector<1x64xf32>
    %24 = arith.mulf %15, %23 : vector<1x64xf32>
    %25 = arith.subf %2, %24 : vector<1x64xf32>
    %26 = vector.broadcast %23 : vector<1x64xf32> to vector<256x64xf32>
    %27 = arith.mulf %7, %26 : vector<256x64xf32>
    %28 = vector.broadcast %25 : vector<1x64xf32> to vector<256x64xf32>
    %29 = arith.addf %27, %28 : vector<256x64xf32>
    %cst_13 = arith.constant 0.000000e+00 : f32
    %30 = vector.broadcast %cst_13 : f32 to vector<256x64xf32>
    %31 = arith.maximumf %29, %30 : vector<256x64xf32>
    %c0_14 = arith.constant 0 : index
    %c0_15 = arith.constant 0 : index
    %32 = vector.load %arg3[%c0_14, %c0_15] : memref<8x64xbf16, #tpu.memory_space<vmem>>, vector<8x64xbf16>
    %33 = arith.truncf %31 : vector<256x64xf32> to vector<256x64xbf16>
    %cst_16 = arith.constant dense<0.000000e+00> : vector<8x256xf32>
    %34 = tpu.matmul %32, %33, %cst_16 {dimension_numbers = #tpu.dot_dimension_numbers<[1], [1], [0], [0], [0, 0, 1, 0], [], []>} : vector<8x64xbf16>, vector<256x64xbf16>, vector<8x256xf32> -> vector<8x256xf32>
    %c0_17 = arith.constant 0 : index
    %c0_18 = arith.constant 0 : index
    %35 = vector.load %arg5[%c0_17, %c0_18] : memref<8x1xf32, #tpu.memory_space<vmem>>, vector<8x1xf32>
    %36 = vector.broadcast %35 : vector<8x1xf32> to vector<8x256xf32>
    %37 = arith.addf %34, %36 : vector<8x256xf32>
    %c0_19 = arith.constant 0 : index
    %c0_20 = arith.constant 0 : index
    %38 = vector.load %arg7[%c0_19, %c0_20] : memref<8x256xf32, #tpu.memory_space<vmem>>, vector<8x256xf32>
    tpu.vector_store %arg7[%c0_19, %c0_20], %37 {strides = array<i32>} : memref<8x256xf32, #tpu.memory_space<vmem>>, vector<8x256xf32>,
    %39 = vector.extract_strided_slice %37 {offsets = [0, 0], sizes = [1, 256], strides = [1, 1]} : vector<8x256xf32> to vector<1x256xf32>
    %40 = vector.extract_strided_slice %37 {offsets = [1, 0], sizes = [1, 256], strides = [1, 1]} : vector<8x256xf32> to vector<1x256xf32>
    %41 = vector.extract_strided_slice %37 {offsets = [2, 0], sizes = [1, 256], strides = [1, 1]} : vector<8x256xf32> to vector<1x256xf32>
    %c3 = arith.constant 3 : index
    %c0_21 = arith.constant 0 : index
    %42 = vector.load %arg6[%c3, %c0_21] : memref<8x256xf32, #tpu.memory_space<vmem>>, vector<1x256xf32>
    %c0_22 = arith.constant 0 : index
    %c0_23 = arith.constant 0 : index
    %43 = vector.load %arg6[%c0_22, %c0_23] : memref<8x256xf32, #tpu.memory_space<vmem>>, vector<1x256xf32>
    %44 = arith.subf %42, %43 : vector<1x256xf32>
    %c4 = arith.constant 4 : index
    %c0_24 = arith.constant 0 : index
    %45 = vector.load %arg6[%c4, %c0_24] : memref<8x256xf32, #tpu.memory_space<vmem>>, vector<1x256xf32>
    %c1_25 = arith.constant 1 : index
    %c0_26 = arith.constant 0 : index
    %46 = vector.load %arg6[%c1_25, %c0_26] : memref<8x256xf32, #tpu.memory_space<vmem>>, vector<1x256xf32>
    %47 = arith.subf %45, %46 : vector<1x256xf32>
    %c5 = arith.constant 5 : index
    %c0_27 = arith.constant 0 : index
    %48 = vector.load %arg6[%c5, %c0_27] : memref<8x256xf32, #tpu.memory_space<vmem>>, vector<1x256xf32>
    %c2_28 = arith.constant 2 : index
    %c0_29 = arith.constant 0 : index
    %49 = vector.load %arg6[%c2_28, %c0_29] : memref<8x256xf32, #tpu.memory_space<vmem>>, vector<1x256xf32>
    %50 = arith.subf %48, %49 : vector<1x256xf32>
    %c6 = arith.constant 6 : index
    %c0_30 = arith.constant 0 : index
    %51 = vector.load %arg6[%c6, %c0_30] : memref<8x256xf32, #tpu.memory_space<vmem>>, vector<1x256xf32>
    %52 = vector.shape_cast %51 : vector<1x256xf32> to vector<1x1x256xf32>
    %cst_31 = arith.constant dense<0.000000e+00> : vector<1xf32>
    %53 = vector.multi_reduction <add>, %52, %cst_31 [1, 2] : vector<1x1x256xf32> to vector<1xf32>
    %54 = vector.shape_cast %53 : vector<1xf32> to vector<1x1x1xf32>
    %55 = vector.extract %54[0, 0, 0] : f32 from vector<1x1x1xf32>
    %cst_32 = arith.constant 9.99999993E-9 : f32
    %56 = arith.addf %55, %cst_32 : f32
    %cst_33 = arith.constant 1.000000e+00 : f32
    %57 = arith.divf %cst_33, %56 : f32
    %58 = arith.subf %39, %44 : vector<1x256xf32>
    %59 = math.absf %58 : vector<1x256xf32>
    %60 = arith.subf %40, %47 : vector<1x256xf32>
    %61 = math.absf %60 : vector<1x256xf32>
    %62 = arith.addf %59, %61 : vector<1x256xf32>
    %63 = arith.mulf %62, %51 : vector<1x256xf32>
    %64 = vector.shape_cast %63 : vector<1x256xf32> to vector<1x1x256xf32>
    %cst_34 = arith.constant dense<0.000000e+00> : vector<1xf32>
    %65 = vector.multi_reduction <add>, %64, %cst_34 [1, 2] : vector<1x1x256xf32> to vector<1xf32>
    %66 = vector.shape_cast %65 : vector<1xf32> to vector<1x1x1xf32>
    %67 = vector.extract %66[0, 0, 0] : f32 from vector<1x1x1xf32>
    %68 = arith.mulf %67, %57 : f32
    %69 = arith.mulf %39, %39 : vector<1x256xf32>
    %70 = arith.mulf %40, %40 : vector<1x256xf32>
    %71 = arith.addf %69, %70 : vector<1x256xf32>
    %72 = arith.mulf %41, %41 : vector<1x256xf32>
    %73 = arith.addf %71, %72 : vector<1x256xf32>
    %74 = arith.mulf %44, %44 : vector<1x256xf32>
    %75 = arith.mulf %47, %47 : vector<1x256xf32>
    %76 = arith.addf %74, %75 : vector<1x256xf32>
    %77 = arith.mulf %50, %50 : vector<1x256xf32>
    %78 = arith.addf %76, %77 : vector<1x256xf32>
    %79 = arith.mulf %39, %44 : vector<1x256xf32>
    %80 = arith.mulf %40, %47 : vector<1x256xf32>
    %81 = arith.addf %79, %80 : vector<1x256xf32>
    %82 = arith.mulf %41, %50 : vector<1x256xf32>
    %83 = arith.addf %81, %82 : vector<1x256xf32>
    %cst_35 = arith.constant 0.000000e+00 : f32
    %84 = vector.broadcast %cst_35 : f32 to vector<1x256xf32>
    %85 = arith.subf %84, %83 : vector<1x256xf32>
    %cst_36 = arith.constant 1.000000e-16 : f32
    %86 = vector.broadcast %cst_36 : f32 to vector<1x256xf32>
    %87 = arith.addf %73, %86 : vector<1x256xf32>
    %88 = math.rsqrt %87 : vector<1x256xf32>
    %89 = arith.mulf %85, %88 : vector<1x256xf32>
    %cst_37 = arith.constant 1.000000e-16 : f32
    %90 = vector.broadcast %cst_37 : f32 to vector<1x256xf32>
    %91 = arith.addf %78, %90 : vector<1x256xf32>
    %92 = math.rsqrt %91 : vector<1x256xf32>
    %93 = arith.mulf %89, %92 : vector<1x256xf32>
    %94 = arith.mulf %93, %51 : vector<1x256xf32>
    %95 = vector.shape_cast %94 : vector<1x256xf32> to vector<1x1x256xf32>
    %cst_38 = arith.constant dense<0.000000e+00> : vector<1xf32>
    %96 = vector.multi_reduction <add>, %95, %cst_38 [1, 2] : vector<1x1x256xf32> to vector<1xf32>
    %97 = vector.shape_cast %96 : vector<1xf32> to vector<1x1x1xf32>
    %98 = vector.extract %97[0, 0, 0] : f32 from vector<1x1x1xf32>
    %99 = arith.mulf %98, %57 : f32
    %100 = arith.addf %68, %99 : f32
    %c0_39 = arith.constant 0 : index
    %101 = memref.load %arg8[%c0_39] : memref<3xf32, #tpu.memory_space<smem>>
    memref.store %100, %arg8[%c0_39] : memref<3xf32, #tpu.memory_space<smem>>
    %c1_40 = arith.constant 1 : index
    %102 = memref.load %arg8[%c1_40] : memref<3xf32, #tpu.memory_space<smem>>
    memref.store %68, %arg8[%c1_40] : memref<3xf32, #tpu.memory_space<smem>>
    %c2_41 = arith.constant 2 : index
    %103 = memref.load %arg8[%c2_41] : memref<3xf32, #tpu.memory_space<smem>>
    memref.store %99, %arg8[%c2_41] : memref<3xf32, #tpu.memory_space<smem>>
    return
  }
  func.func @transform_0(%arg0: i32) -> (i32, i32) {
    %c0_i32 = arith.constant 0 : i32
    %c0_i32_0 = arith.constant 0 : i32
    %c0_i32_1 = arith.constant 0 : i32
    return %c0_i32, %c0_i32_0 : i32, i32
  }
  func.func @transform_1(%arg0: i32) -> (i32, i32) {
    %c0_i32 = arith.constant 0 : i32
    %c0_i32_0 = arith.constant 0 : i32
    %c0_i32_1 = arith.constant 0 : i32
    return %c0_i32, %c0_i32_0 : i32, i32
  }
  func.func @transform_2(%arg0: i32) -> (i32, i32) {
    %c0_i32 = arith.constant 0 : i32
    %c0_i32_0 = arith.constant 0 : i32
    %c0_i32_1 = arith.constant 0 : i32
    return %c0_i32, %c0_i32_0 : i32, i32
  }
  func.func @transform_3(%arg0: i32) -> (i32, i32) {
    %c0_i32 = arith.constant 0 : i32
    %c0_i32_0 = arith.constant 0 : i32
    %c0_i32_1 = arith.constant 0 : i32
    return %c0_i32, %c0_i32_0 : i32, i32
  }
  func.func @transform_4(%arg0: i32) -> (i32, i32) {
    %c0_i32 = arith.constant 0 : i32
    %c0_i32_0 = arith.constant 0 : i32
    %c0_i32_1 = arith.constant 0 : i32
    return %c0_i32, %c0_i32_0 : i32, i32
  }
  func.func @transform_5(%arg0: i32) -> (i32, i32) {
    %c0_i32 = arith.constant 0 : i32
    %c0_i32_0 = arith.constant 0 : i32
    %c0_i32_1 = arith.constant 0 : i32
    return %c0_i32, %c0_i32_0 : i32, i32
  }
  func.func @transform_6(%arg0: i32) -> (i32, i32) {
    %c0_i32 = arith.constant 0 : i32
    %c0_i32_0 = arith.constant 0 : i32
    %c0_i32_1 = arith.constant 0 : i32
    return %c0_i32, %c0_i32_0 : i32, i32
  }
  func.func @transform_7(%arg0: i32) -> i32 {
    %c0_i32 = arith.constant 0 : i32
    %c0_i32_0 = arith.constant 0 : i32
    return %c0_i32 : i32
  }
}

</mosaic_0001>

<llo_original>
// kernel: tpu_custom_call.1
$region0: #{tpu_custom_call.1}
  #allocation0 [shape = 'u32[]', space=smem, size = 0x4, offset = 0x4, fixed_abs, tag = 'smem constant byte address 0x4 - core index']
  #allocation1 [shape = 'u32[72,128]{1,0:T(1,128)}', space=vmem, size = 0x9000, scoped, tag = 'internal scratch']
  %s0 = inlined_call_operand.vmem [shape: bf16[256,64], index: 0, kind: input, shape index: {}]
  %s1 = inlined_call_operand.vmem [shape: bf16[64,64], index: 1, kind: input, shape index: {}]
  %s2 = inlined_call_operand.vmem [shape: bf16[8,64], index: 2, kind: input, shape index: {}]
  %s3 = inlined_call_operand.vmem [shape: f32[8,64], index: 3, kind: input, shape index: {}]
  %s4 = inlined_call_operand.vmem [shape: f32[8,1], index: 4, kind: input, shape index: {}]
  %s5 = inlined_call_operand.vmem [shape: f32[8,256], index: 5, kind: input, shape index: {}]
  %s6 = inlined_call_operand.hbm [shape: f32[8,256], index: 6, kind: output, shape index: {0}]
  %s7 = inlined_call_operand.hbm [shape: f32[3], index: 7, kind: output, shape index: {1}]
  %8 = xla_tuple %s6, %s7
  %s9 = sld [smem:[#allocation0]]
  $region42: #{tpu_custom_call.1} parent=0
    _
  %s11 = ssub.s32 1, %s9
  %s12 = scalar_select 0, %s11, %s9
  $region1: #{tpu_custom_call.1} parent=0
    #allocation2 [shape = 'u8[8192]{0}', space=vmem, size = 0x2000, scoped, tag = 'output window, operand 0, single buffered']
    #allocation3 [shape = 's32[1]{0}', space=sflag, size = 0x4, scoped, tag = 'scoped memory for tpu_custom_call.1']
    #allocation4 [shape = 's32[1]{0}', space=sflag, size = 0x4, scoped, tag = 'scoped memory for tpu_custom_call.1']
    #allocation5 [shape = 'u8[512]{0}', space=smem, size = 0x200, scoped, tag = 'output window, operand 1, single buffered']
    %13 = vsyncpa [#allocation3], 0
    %14 = vsyncpa [#allocation4], 0
    // Predicated region
    $region2: #{tpu_custom_call.1} parent=1 // pred_check
      _
    $region3: #{tpu_custom_call.1} parent=1 // pred_check_branch
      %16 = sbr.rel (0) target = $region5
    $region4: #{tpu_custom_call.1} parent=1 // pred_region
      _
    $region5: #{tpu_custom_call.1} parent=1 // pred_fallthru
      _
    // Predicated region
    $region6: #{tpu_custom_call.1} parent=1 // pred_check
      _
    $region7: #{tpu_custom_call.1} parent=1 // pred_check_branch
      %18 = sbr.rel (0) target = $region9
    $region8: #{tpu_custom_call.1} parent=1 // pred_region
      _
    $region9: #{tpu_custom_call.1} parent=1 // pred_fallthru
      _
    // Predicated region
    $region10: #{tpu_custom_call.1} parent=1 // pred_check
      _
    $region11: #{tpu_custom_call.1} parent=1 // pred_check_branch
      %20 = sbr.rel (0) target = $region13
    $region12: #{tpu_custom_call.1} parent=1 // pred_region
      _
    $region13: #{tpu_custom_call.1} parent=1 // pred_fallthru
      _
    // Predicated region
    $region14: #{tpu_custom_call.1} parent=1 // pred_check
      _
    $region15: #{tpu_custom_call.1} parent=1 // pred_check_branch
      %22 = sbr.rel (0) target = $region17
    $region16: #{tpu_custom_call.1} parent=1 // pred_region
      _
    $region17: #{tpu_custom_call.1} parent=1 // pred_fallthru
      _
    // Predicated region
    $region18: #{tpu_custom_call.1} parent=1 // pred_check
      _
    $region19: #{tpu_custom_call.1} parent=1 // pred_check_branch
      %24 = sbr.rel (0) target = $region21
    $region20: #{tpu_custom_call.1} parent=1 // pred_region
      _
    $region21: #{tpu_custom_call.1} parent=1 // pred_fallthru
      _
    // Predicated region
    $region22: #{tpu_custom_call.1} parent=1 // pred_check
      _
    $region23: #{tpu_custom_call.1} parent=1 // pred_check_branch
      %26 = sbr.rel (0) target = $region25
    $region24: #{tpu_custom_call.1} parent=1 // pred_region
      _
    $region25: #{tpu_custom_call.1} parent=1 // pred_fallthru
      _
    %v28 = vld [vmem:[%s3] sm:$0x1]
    %v29 = vld [vmem:[%s3 + $0x1] sm:$0x1]
    %v30 = vld [vmem:[%s3 + $0x2] sm:$0x1]
    %v31 = vld [vmem:[%s0] sm:$0xf]
    %v32 = vld [vmem:[%s0 + $0x4] sm:$0xf]
    %v33 = vld [vmem:[%s0 + $0x8] sm:$0xf]
    %v34 = vld [vmem:[%s0 + $0xc] sm:$0xf]
    %v35 = vld [vmem:[%s0 + $0x10] sm:$0xf]
    %v36 = vld [vmem:[%s0 + $0x14] sm:$0xf]
    %v37 = vld [vmem:[%s0 + $0x18] sm:$0xf]
    %v38 = vld [vmem:[%s0 + $0x1c] sm:$0xf]
    %v39 = vld [vmem:[%s0 + $0x20] sm:$0xf]
    %v40 = vld [vmem:[%s0 + $0x24] sm:$0xf]
    %v41 = vld [vmem:[%s0 + $0x28] sm:$0xf]
    %v42 = vld [vmem:[%s0 + $0x2c] sm:$0xf]
    %v43 = vld [vmem:[%s0 + $0x30] sm:$0xf]
    %v44 = vld [vmem:[%s0 + $0x34] sm:$0xf]
    %v45 = vld [vmem:[%s0 + $0x38] sm:$0xf]
    %v46 = vld [vmem:[%s0 + $0x3c] sm:$0xf]
    %v47 = vld [vmem:[%s0 + $0x40] sm:$0xf]
    %v48 = vld [vmem:[%s0 + $0x44] sm:$0xf]
    %v49 = vld [vmem:[%s0 + $0x48] sm:$0xf]
    %v50 = vld [vmem:[%s0 + $0x4c] sm:$0xf]
    %v51 = vld [vmem:[%s0 + $0x50] sm:$0xf]
    %v52 = vld [vmem:[%s0 + $0x54] sm:$0xf]
    %v53 = vld [vmem:[%s0 + $0x58] sm:$0xf]
    %v54 = vld [vmem:[%s0 + $0x5c] sm:$0xf]
    %v55 = vld [vmem:[%s0 + $0x60] sm:$0xf]
    %v56 = vld [vmem:[%s0 + $0x64] sm:$0xf]
    %v57 = vld [vmem:[%s0 + $0x68] sm:$0xf]
    %v58 = vld [vmem:[%s0 + $0x6c] sm:$0xf]
    %v59 = vld [vmem:[%s0 + $0x70] sm:$0xf]
    %v60 = vld [vmem:[%s0 + $0x74] sm:$0xf]
    %v61 = vld [vmem:[%s0 + $0x78] sm:$0xf]
    %v62 = vld [vmem:[%s0 + $0x7c] sm:$0xf]
    %v63 = vld [vmem:[%s1] sm:$0xf]
    %v64 = vld [vmem:[%s1 + $0x4] sm:$0xf]
    %v65 = vld [vmem:[%s1 + $0x8] sm:$0xf]
    %v66 = vld [vmem:[%s1 + $0xc] sm:$0xf]
    %v67 = vld [vmem:[%s1 + $0x10] sm:$0xf]
    %v68 = vld [vmem:[%s1 + $0x14] sm:$0xf]
    %v69 = vld [vmem:[%s1 + $0x18] sm:$0xf]
    %v70 = vld [vmem:[%s1 + $0x1c] sm:$0xf]
    %v71 = vperm.slane %v28, 0
    %v104 = vunpack.c.l.b16 %v31
    %v105 = vunpack.c.l.b16 %v32
    %v106 = vunpack.c.l.b16 %v33
    %v107 = vunpack.c.l.b16 %v34
    %v108 = vunpack.c.l.b16 %v35
    %v109 = vunpack.c.l.b16 %v36
    %v110 = vunpack.c.l.b16 %v37
    %v111 = vunpack.c.l.b16 %v38
    %v112 = vunpack.c.l.b16 %v39
    %v113 = vunpack.c.l.b16 %v40
    %v114 = vunpack.c.l.b16 %v41
    %v115 = vunpack.c.l.b16 %v42
    %v116 = vunpack.c.l.b16 %v43
    %v117 = vunpack.c.l.b16 %v44
    %v118 = vunpack.c.l.b16 %v45
    %v119 = vunpack.c.l.b16 %v46
    %v120 = vunpack.c.l.b16 %v47
    %v121 = vunpack.c.l.b16 %v48
    %v122 = vunpack.c.l.b16 %v49
    %v123 = vunpack.c.l.b16 %v50
    %v124 = vunpack.c.l.b16 %v51
    %v125 = vunpack.c.l.b16 %v52
    %v126 = vunpack.c.l.b16 %v53
    %v127 = vunpack.c.l.b16 %v54
    %v128 = vunpack.c.l.b16 %v55
    %v129 = vunpack.c.l.b16 %v56
    %v130 = vunpack.c.l.b16 %v57
    %v131 = vunpack.c.l.b16 %v58
    %v132 = vunpack.c.l.b16 %v59
    %v133 = vunpack.c.l.b16 %v60
    %v134 = vunpack.c.l.b16 %v61
    %v135 = vunpack.c.l.b16 %v62
    %v136 = vpack.c.b16 %v105, %v104
    %v137 = vpack.c.b16 %v107, %v106
    %v138 = vpack.c.b16 %v109, %v108
    %v139 = vpack.c.b16 %v111, %v110
    %v140 = vpack.c.b16 %v113, %v112
    %v141 = vpack.c.b16 %v115, %v114
    %v142 = vpack.c.b16 %v117, %v116
    %v143 = vpack.c.b16 %v119, %v118
    %v144 = vpack.c.b16 %v121, %v120
    %v145 = vpack.c.b16 %v123, %v122
    %v146 = vpack.c.b16 %v125, %v124
    %v147 = vpack.c.b16 %v127, %v126
    %v148 = vpack.c.b16 %v129, %v128
    %v149 = vpack.c.b16 %v131, %v130
    %v150 = vpack.c.b16 %v133, %v132
    %v151 = vpack.c.b16 %v135, %v134
    %v160 = vunpack.c.l.b16 %v63
    %v161 = vunpack.c.l.b16 %v64
    %v162 = vunpack.c.l.b16 %v65
    %v163 = vunpack.c.l.b16 %v66
    %v164 = vunpack.c.l.b16 %v67
    %v165 = vunpack.c.l.b16 %v68
    %v166 = vunpack.c.l.b16 %v69
    %v167 = vunpack.c.l.b16 %v70
    %v168 = vpack.c.b16 %v161, %v160
    %v169 = vpack.c.b16 %v163, %v162
    %v170 = vpack.c.b16 %v165, %v164
    %v171 = vpack.c.b16 %v167, %v166
    %vm176 = vcmask 523264
    %v178 = vsel %vm176, %v136, 0
    %v181 = vsel %vm176, %v137, 0
    %v184 = vsel %vm176, %v138, 0
    %v187 = vsel %vm176, %v139, 0
    %v190 = vsel %vm176, %v140, 0
    %v193 = vsel %vm176, %v141, 0
    %v196 = vsel %vm176, %v142, 0
    %v199 = vsel %vm176, %v143, 0
    %v202 = vsel %vm176, %v144, 0
    %v205 = vsel %vm176, %v145, 0
    %v208 = vsel %vm176, %v146, 0
    %v211 = vsel %vm176, %v147, 0
    %v214 = vsel %vm176, %v148, 0
    %v217 = vsel %vm176, %v149, 0
    %v220 = vsel %vm176, %v150, 0
    %v223 = vsel %vm176, %v151, 0
    %225 = vmatpush.bf16.msra.mxu0 0
    %226 = vmatpush.bf16.msra.mxu0 0
    %227 = vmatpush.bf16.msra.mxu0 0
    %228 = vmatpush.bf16.msra.mxu0 0
    %229 = vmatpush.bf16.msra.mxu0 %v171
    %230 = vmatpush.bf16.msra.mxu0 %v170
    %231 = vmatpush.bf16.msra.mxu0 %v169
    %232 = vmatpush.bf16.msra.mxu0 %v168
    %233 = vmatmul.bf16.gmra.mxu0 %v178
    %v234 = vpop.f32.mrf.mxu0
    %v235 = vadd.f32 %v71, %v234
    %v236 = vpop.f32.mrf.mxu0
    %v237 = vadd.f32 %v71, %v236
    %238 = vmatmul.bf16.gmra.mxu0 %v181
    %v239 = vpop.f32.mrf.mxu0
    %v240 = vadd.f32 %v71, %v239
    %v241 = vpop.f32.mrf.mxu0
    %v242 = vadd.f32 %v71, %v241
    %243 = vmatmul.bf16.gmra.mxu0 %v184
    %v244 = vpop.f32.mrf.mxu0
    %v245 = vadd.f32 %v71, %v244
    %v246 = vpop.f32.mrf.mxu0
    %v247 = vadd.f32 %v71, %v246
    %248 = vmatmul.bf16.gmra.mxu0 %v187
    %v249 = vpop.f32.mrf.mxu0
    %v250 = vadd.f32 %v71, %v249
    %v251 = vpop.f32.mrf.mxu0
    %v252 = vadd.f32 %v71, %v251
    %253 = vmatmul.bf16.gmra.mxu0 %v190
    %v254 = vpop.f32.mrf.mxu0
    %v255 = vadd.f32 %v71, %v254
    %v256 = vpop.f32.mrf.mxu0
    %v257 = vadd.f32 %v71, %v256
    %258 = vmatmul.bf16.gmra.mxu0 %v193
    %v259 = vpop.f32.mrf.mxu0
    %v260 = vadd.f32 %v71, %v259
    %v261 = vpop.f32.mrf.mxu0
    %v262 = vadd.f32 %v71, %v261
    %263 = vmatmul.bf16.gmra.mxu0 %v196
    %v264 = vpop.f32.mrf.mxu0
    %v265 = vadd.f32 %v71, %v264
    %v266 = vpop.f32.mrf.mxu0
    %v267 = vadd.f32 %v71, %v266
    %268 = vmatmul.bf16.gmra.mxu0 %v199
    %v269 = vpop.f32.mrf.mxu0
    %v270 = vadd.f32 %v71, %v269
    %v271 = vpop.f32.mrf.mxu0
    %v272 = vadd.f32 %v71, %v271
    %273 = vmatmul.bf16.gmra.mxu0 %v202
    %v274 = vpop.f32.mrf.mxu0
    %v275 = vadd.f32 %v71, %v274
    %v276 = vpop.f32.mrf.mxu0
    %v277 = vadd.f32 %v71, %v276
    %278 = vmatmul.bf16.gmra.mxu0 %v205
    %v279 = vpop.f32.mrf.mxu0
    %v280 = vadd.f32 %v71, %v279
    %v281 = vpop.f32.mrf.mxu0
    %v282 = vadd.f32 %v71, %v281
    %283 = vmatmul.bf16.gmra.mxu0 %v208
    %v284 = vpop.f32.mrf.mxu0
    %v285 = vadd.f32 %v71, %v284
    %v286 = vpop.f32.mrf.mxu0
    %v287 = vadd.f32 %v71, %v286
    %288 = vmatmul.bf16.gmra.mxu0 %v211
    %v289 = vpop.f32.mrf.mxu0
    %v290 = vadd.f32 %v71, %v289
    %v291 = vpop.f32.mrf.mxu0
    %v292 = vadd.f32 %v71, %v291
    %293 = vmatmul.bf16.gmra.mxu0 %v214
    %v294 = vpop.f32.mrf.mxu0
    %v295 = vadd.f32 %v71, %v294
    %v296 = vpop.f32.mrf.mxu0
    %v297 = vadd.f32 %v71, %v296
    %298 = vmatmul.bf16.gmra.mxu0 %v217
    %v299 = vpop.f32.mrf.mxu0
    %v300 = vadd.f32 %v71, %v299
    %v301 = vpop.f32.mrf.mxu0
    %v302 = vadd.f32 %v71, %v301
    %303 = vmatmul.bf16.gmra.mxu0 %v220
    %v304 = vpop.f32.mrf.mxu0
    %v305 = vadd.f32 %v71, %v304
    %v306 = vpop.f32.mrf.mxu0
    %v307 = vadd.f32 %v71, %v306
    %308 = vmatmul.bf16.gmra.mxu0 %v223
    %v309 = vpop.f32.mrf.mxu0
    %v310 = vadd.f32 %v71, %v309
    %v311 = vpop.f32.mrf.mxu0
    %v312 = vadd.f32 %v71, %v311
    %313 = vdwg.mxu0
    %314 = vmatpush.msra.mxu0 %v272
    %315 = vmatpush.msra.mxu0 %v270
    %316 = vmatpush.msra.mxu0 %v267
    %317 = vmatpush.msra.mxu0 %v265
    %318 = vmatpush.msra.mxu0 %v262
    %319 = vmatpush.msra.mxu0 %v260
    %320 = vmatpush.msra.mxu0 %v257
    %321 = vmatpush.msra.mxu0 %v255
    %322 = vmatpush.msra.mxu0 %v252
    %323 = vmatpush.msra.mxu0 %v250
    %324 = vmatpush.msra.mxu0 %v247
    %325 = vmatpush.msra.mxu0 %v245
    %326 = vmatpush.msra.mxu0 %v242
    %327 = vmatpush.msra.mxu0 %v240
    %328 = vmatpush.msra.mxu0 %v237
    %329 = vmatpush.msra.mxu0 %v235
    %330 = vmatmul.f32.gmra.mxu0 1.0
    %v331 = vpop.f32.mrf.mxu0
    %v332 = vadd.f32 0.0, %v331
    %333 = vdwg.mxu0
    %334 = vmatpush.msra.mxu0 %v312
    %335 = vmatpush.msra.mxu0 %v310
    %336 = vmatpush.msra.mxu0 %v307
    %337 = vmatpush.msra.mxu0 %v305
    %338 = vmatpush.msra.mxu0 %v302
    %339 = vmatpush.msra.mxu0 %v300
    %340 = vmatpush.msra.mxu0 %v297
    %341 = vmatpush.msra.mxu0 %v295
    %342 = vmatpush.msra.mxu0 %v292
    %343 = vmatpush.msra.mxu0 %v290
    %344 = vmatpush.msra.mxu0 %v287
    %345 = vmatpush.msra.mxu0 %v285
    %346 = vmatpush.msra.mxu0 %v282
    %347 = vmatpush.msra.mxu0 %v280
    %348 = vmatpush.msra.mxu0 %v277
    %349 = vmatpush.msra.mxu0 %v275
    %350 = vmatmul.f32.gmra.mxu0 1.0
    %v351 = vpop.f32.mrf.mxu0
    %v352 = vadd.f32 %v332, %v351
    %353 = vdwg.mxu0
    %v354 = vmul.f32 %v235, %v235
    %v355 = vmul.f32 %v237, %v237
    %v356 = vmul.f32 %v240, %v240
    %v357 = vmul.f32 %v242, %v242
    %v358 = vmul.f32 %v245, %v245
    %v359 = vmul.f32 %v247, %v247
    %v360 = vmul.f32 %v250, %v250
    %v361 = vmul.f32 %v252, %v252
    %v362 = vmul.f32 %v255, %v255
    %v363 = vmul.f32 %v257, %v257
    %v364 = vmul.f32 %v260, %v260
    %v365 = vmul.f32 %v262, %v262
    %v366 = vmul.f32 %v265, %v265
    %v367 = vmul.f32 %v267, %v267
    %v368 = vmul.f32 %v270, %v270
    %v369 = vmul.f32 %v272, %v272
    %v370 = vmul.f32 %v275, %v275
    %v371 = vmul.f32 %v277, %v277
    %v372 = vmul.f32 %v280, %v280
    %v373 = vmul.f32 %v282, %v282
    %v374 = vmul.f32 %v285, %v285
    %v375 = vmul.f32 %v287, %v287
    %v376 = vmul.f32 %v290, %v290
    %v377 = vmul.f32 %v292, %v292
    %v378 = vmul.f32 %v295, %v295
    %v379 = vmul.f32 %v297, %v297
    %v380 = vmul.f32 %v300, %v300
    %v381 = vmul.f32 %v302, %v302
    %v382 = vmul.f32 %v305, %v305
    %v383 = vmul.f32 %v307, %v307
    %v384 = vmul.f32 %v310, %v310
    %v385 = vmul.f32 %v312, %v312
    %386 = vmatpush.msra.mxu0 %v369
    %387 = vmatpush.msra.mxu0 %v368
    %388 = vmatpush.msra.mxu0 %v367
    %389 = vmatpush.msra.mxu0 %v366
    %390 = vmatpush.msra.mxu0 %v365
    %391 = vmatpush.msra.mxu0 %v364
    %392 = vmatpush.msra.mxu0 %v363
    %393 = vmatpush.msra.mxu0 %v362
    %394 = vmatpush.msra.mxu0 %v361
    %395 = vmatpush.msra.mxu0 %v360
    %396 = vmatpush.msra.mxu0 %v359
    %397 = vmatpush.msra.mxu0 %v358
    %398 = vmatpush.msra.mxu0 %v357
    %399 = vmatpush.msra.mxu0 %v356
    %400 = vmatpush.msra.mxu0 %v355
    %401 = vmatpush.msra.mxu0 %v354
    %402 = vmatmul.f32.gmra.mxu0 1.0
    %v403 = vpop.f32.mrf.mxu0
    %v404 = vadd.f32 0.0, %v403
    %405 = vdwg.mxu0
    %406 = vmatpush.msra.mxu0 %v385
    %407 = vmatpush.msra.mxu0 %v384
    %408 = vmatpush.msra.mxu0 %v383
    %409 = vmatpush.msra.mxu0 %v382
    %410 = vmatpush.msra.mxu0 %v381
    %411 = vmatpush.msra.mxu0 %v380
    %412 = vmatpush.msra.mxu0 %v379
    %413 = vmatpush.msra.mxu0 %v378
    %414 = vmatpush.msra.mxu0 %v377
    %415 = vmatpush.msra.mxu0 %v376
    %416 = vmatpush.msra.mxu0 %v375
    %417 = vmatpush.msra.mxu0 %v374
    %418 = vmatpush.msra.mxu0 %v373
    %419 = vmatpush.msra.mxu0 %v372
    %420 = vmatpush.msra.mxu0 %v371
    %421 = vmatpush.msra.mxu0 %v370
    %422 = vmatmul.f32.gmra.mxu0 1.0
    %v423 = vpop.f32.mrf.mxu0
    %v424 = vadd.f32 %v404, %v423
    %425 = vdwg.mxu0
    %v426 = vmul.f32 %v352, 0.00390625
    %v427 = vmul.f32 %v424, 0.00390625
    %v428 = vmul.f32 %v426, %v426
    %v429 = vsub.f32 %v427, %v428
    %v430 = vadd.f32 %v429, 0.001
    %v431 = vrsqrt.pop %v430
    %v432 = vmul.f32 %v431, %v430
    %v433 = vmul.f32 %v432, %v431
    %v434 = vmul.f32 0.5, %v433
    %v435 = vsub.f32 1.5, %v434
    %v436 = vmul.f32 %v431, %v435
    %vm437 = vweird.f32 %v430
    %vm438 = vweird.f32 %v431
    %vm439 = vmor %vm437, %vm438
    %v440 = vsel %vm439, %v431, %v436
    %v441 = vmul.f32 %v29, %v440
    %v442 = vmul.f32 %v426, %v441
    %v443 = vsub.f32 %v30, %v442
    %v444 = vperm.slane %v441, 0
    %v445 = vmul.f32 %v235, %v444
    %v446 = vmul.f32 %v237, %v444
    %v447 = vmul.f32 %v240, %v444
    %v448 = vmul.f32 %v242, %v444
    %v449 = vmul.f32 %v245, %v444
    %v450 = vmul.f32 %v247, %v444
    %v451 = vmul.f32 %v250, %v444
    %v452 = vmul.f32 %v252, %v444
    %v453 = vmul.f32 %v255, %v444
    %v454 = vmul.f32 %v257, %v444
    %v455 = vmul.f32 %v260, %v444
    %v456 = vmul.f32 %v262, %v444
    %v457 = vmul.f32 %v265, %v444
    %v458 = vmul.f32 %v267, %v444
    %v459 = vmul.f32 %v270, %v444
    %v460 = vmul.f32 %v272, %v444
    %v461 = vmul.f32 %v275, %v444
    %v462 = vmul.f32 %v277, %v444
    %v463 = vmul.f32 %v280, %v444
    %v464 = vmul.f32 %v282, %v444
    %v465 = vmul.f32 %v285, %v444
    %v466 = vmul.f32 %v287, %v444
    %v467 = vmul.f32 %v290, %v444
    %v468 = vmul.f32 %v292, %v444
    %v469 = vmul.f32 %v295, %v444
    %v470 = vmul.f32 %v297, %v444
    %v471 = vmul.f32 %v300, %v444
    %v472 = vmul.f32 %v302, %v444
    %v473 = vmul.f32 %v305, %v444
    %v474 = vmul.f32 %v307, %v444
    %v475 = vmul.f32 %v310, %v444
    %v476 = vmul.f32 %v312, %v444
    %v477 = vperm.slane %v443, 0
    %v478 = vadd.f32 %v445, %v477
    %v479 = vadd.f32 %v446, %v477
    %v480 = vadd.f32 %v447, %v477
    %v481 = vadd.f32 %v448, %v477
    %v482 = vadd.f32 %v449, %v477
    %v483 = vadd.f32 %v450, %v477
    %v484 = vadd.f32 %v451, %v477
    %v485 = vadd.f32 %v452, %v477
    %v486 = vadd.f32 %v453, %v477
    %v487 = vadd.f32 %v454, %v477
    %v488 = vadd.f32 %v455, %v477
    %v489 = vadd.f32 %v456, %v477
    %v490 = vadd.f32 %v457, %v477
    %v491 = vadd.f32 %v458, %v477
    %v492 = vadd.f32 %v459, %v477
    %v493 = vadd.f32 %v460, %v477
    %v494 = vadd.f32 %v461, %v477
    %v495 = vadd.f32 %v462, %v477
    %v496 = vadd.f32 %v463, %v477
    %v497 = vadd.f32 %v464, %v477
    %v498 = vadd.f32 %v465, %v477
    %v499 = vadd.f32 %v466, %v477
    %v500 = vadd.f32 %v467, %v477
    %v501 = vadd.f32 %v468, %v477
    %v502 = vadd.f32 %v469, %v477
    %v503 = vadd.f32 %v470, %v477
    %v504 = vadd.f32 %v471, %v477
    %v505 = vadd.f32 %v472, %v477
    %v506 = vadd.f32 %v473, %v477
    %v507 = vadd.f32 %v474, %v477
    %v508 = vadd.f32 %v475, %v477
    %v509 = vadd.f32 %v476, %v477
    %v510 = vmax.f32 %v478, 0.0
    %v511 = vmax.f32 %v479, 0.0
    %v512 = vmax.f32 %v480, 0.0
    %v513 = vmax.f32 %v481, 0.0
    %v514 = vmax.f32 %v482, 0.0
    %v515 = vmax.f32 %v483, 0.0
    %v516 = vmax.f32 %v484, 0.0
    %v517 = vmax.f32 %v485, 0.0
    %v518 = vmax.f32 %v486, 0.0
    %v519 = vmax.f32 %v487, 0.0
    %v520 = vmax.f32 %v488, 0.0
    %v521 = vmax.f32 %v489, 0.0
    %v522 = vmax.f32 %v490, 0.0
    %v523 = vmax.f32 %v491, 0.0
    %v524 = vmax.f32 %v492, 0.0
    %v525 = vmax.f32 %v493, 0.0
    %v526 = vmax.f32 %v494, 0.0
    %v527 = vmax.f32 %v495, 0.0
    %v528 = vmax.f32 %v496, 0.0
    %v529 = vmax.f32 %v497, 0.0
    %v530 = vmax.f32 %v498, 0.0
    %v531 = vmax.f32 %v499, 0.0
    %v532 = vmax.f32 %v500, 0.0
    %v533 = vmax.f32 %v501, 0.0
    %v534 = vmax.f32 %v502, 0.0
    %v535 = vmax.f32 %v503, 0.0
    %v536 = vmax.f32 %v504, 0.0
    %v537 = vmax.f32 %v505, 0.0
    %v538 = vmax.f32 %v506, 0.0
    %v539 = vmax.f32 %v507, 0.0
    %v540 = vmax.f32 %v508, 0.0
    %v541 = vmax.f32 %v509, 0.0
    %v542 = vld [vmem:[%s2] sm:$0xf]
    %v543 = vpack.c.bf16 %v511, %v510
    %v544 = vpack.c.bf16 %v513, %v512
    %v545 = vpack.c.bf16 %v515, %v514
    %v546 = vpack.c.bf16 %v517, %v516
    %v547 = vpack.c.bf16 %v519, %v518
    %v548 = vpack.c.bf16 %v521, %v520
    %v549 = vpack.c.bf16 %v523, %v522
    %v550 = vpack.c.bf16 %v525, %v524
    %v551 = vpack.c.bf16 %v527, %v526
    %v552 = vpack.c.bf16 %v529, %v528
    %v553 = vpack.c.bf16 %v531, %v530
    %v554 = vpack.c.bf16 %v533, %v532
    %v555 = vpack.c.bf16 %v535, %v534
    %v556 = vpack.c.bf16 %v537, %v536
    %v557 = vpack.c.bf16 %v539, %v538
    %v558 = vpack.c.bf16 %v541, %v540
    %v559 = vld [vmem:[%s4] sm:$0xff]
    %561 = vset.pattern.permute.xlu0 0
    %562 = vperm.xlu0 %561, %v559
    %v563 = vpop.permute.xlu0 %562
    %v566 = vsel %vm176, %v542, 0
    %v569 = vsel %vm176, %v543, 0
    %v572 = vsel %vm176, %v544, 0
    %v575 = vsel %vm176, %v545, 0
    %v578 = vsel %vm176, %v546, 0
    %v581 = vsel %vm176, %v547, 0
    %v584 = vsel %vm176, %v548, 0
    %v587 = vsel %vm176, %v549, 0
    %v590 = vsel %vm176, %v550, 0
    %v593 = vsel %vm176, %v551, 0
    %v596 = vsel %vm176, %v552, 0
    %v599 = vsel %vm176, %v553, 0
    %v602 = vsel %vm176, %v554, 0
    %v605 = vsel %vm176, %v555, 0
    %v608 = vsel %vm176, %v556, 0
    %v611 = vsel %vm176, %v557, 0
    %v614 = vsel %vm176, %v558, 0
    %616 = vmatpush.bf16.xpose.msra.mxu0 %v590
    %617 = vmatpush.bf16.xpose.msra.mxu0 %v587
    %618 = vmatpush.bf16.xpose.msra.mxu0 %v584
    %619 = vmatpush.bf16.xpose.msra.mxu0 %v581
    %620 = vmatpush.bf16.xpose.msra.mxu0 %v578
    %621 = vmatpush.bf16.xpose.msra.mxu0 %v575
    %622 = vmatpush.bf16.xpose.msra.mxu0 %v572
    %623 = vmatpush.bf16.xpose.msra.mxu0 %v569
    %624 = vmatmul.bf16.gmra.mxu0 %v566
    %v625 = vpop.f32.mrf.mxu0
    %v626 = vadd.f32 %v563, %v625
    %v627 = vpop.f32.mrf.mxu0
    %628 = vdwg.mxu0
    %629 = vmatpush.bf16.xpose.msra.mxu0 %v614
    %630 = vmatpush.bf16.xpose.msra.mxu0 %v611
    %631 = vmatpush.bf16.xpose.msra.mxu0 %v608
    %632 = vmatpush.bf16.xpose.msra.mxu0 %v605
    %633 = vmatpush.bf16.xpose.msra.mxu0 %v602
    %634 = vmatpush.bf16.xpose.msra.mxu0 %v599
    %635 = vmatpush.bf16.xpose.msra.mxu0 %v596
    %636 = vmatpush.bf16.xpose.msra.mxu0 %v593
    %637 = vmatmul.bf16.gmra.mxu0 %v566
    %v638 = vpop.f32.mrf.mxu0
    %v639 = vadd.f32 %v563, %v638
    %v640 = vpop.f32.mrf.mxu0
    %641 = vdwg.mxu0
    %642 = vst [vmem:[#allocation2] sm:$0xff] %v626
    %643 = vst [vmem:[#allocation2 + $0x8] sm:$0xff] %v639
    %s644 = scalar_lea.vmem %s5, 3
    %v645 = vld [vmem:[%s644] ss:$8 sm:$0x3]
    %v646 = vld [vmem:[%s5] ss:$8 sm:$0x3]
    %v647 = vsub.f32 %v645, %v646
    %s648 = scalar_lea.vmem %s5, 4
    %v649 = vld [vmem:[%s648] ss:$8 sm:$0x3]
    %s650 = scalar_lea.vmem %s5, 1
    %v651 = vld [vmem:[%s650] ss:$8 sm:$0x3]
    %v652 = vsub.f32 %v649, %v651
    %s653 = scalar_lea.vmem %s5, 5
    %v654 = vld [vmem:[%s653] ss:$8 sm:$0x3]
    %s655 = scalar_lea.vmem %s5, 2
    %v656 = vld [vmem:[%s655] ss:$8 sm:$0x3]
    %v657 = vsub.f32 %v654, %v656
    %s658 = scalar_lea.vmem %s5, 6
    %v659 = vld [vmem:[%s658] ss:$8 sm:$0x3]
    %v661 = vperm.slane %v659, 0
    %v662 = vperm.slane %v659, 1
    %vm665 = vcmask 1040384
    %v666 = vsel %vm665, %v661, 0.0
    %v667 = vsel %vm665, %v662, 0.0
    %v668 = vadd.f32 %v666, %v667
    %669 = vadd.xlane.f32.xlu0 %v668
    %v670 = vpop.xlane.xlu0 %669
    %v671 = vrot.slane %v670, 4
    %v672 = vadd.f32 %v670, %v671
    %v673 = vrot.slane %v672, 2
    %v674 = vadd.f32 %v672, %v673
    %v675 = vrot.slane %v674, 1
    %v676 = vadd.f32 %v674, %v675
    %s677 = vtos %v676
    %s678 = sadd.f32 %s677, 1e-08
    %v679 = vstv %s678
    %v680 = vrcp.pop %v679
    %v681 = vmul.f32 %v679, %v680
    %v682 = vsub.f32 1.0, %v681
    %v683 = vmul.f32 %v680, %v682
    %v684 = vadd.f32 %v680, %v683
    %vm685 = vweird.f32 %v679
    %vm686 = vweird.f32 %v680
    %vm687 = vmor %vm685, %vm686
    %v688 = vsel %vm687, %v680, %v684
    %v689 = vand.u32 2147483647, %v679
    %vm690 = vcmp.eq.f32.partialorder %v689, 8.507059e+37
    %v691 = vand.u32 %v679, 2147483648
    %v692 = vor.u32 1.1754944e-38, %v691
    %v693 = vsel %vm690, %v692, %v688
    %s694 = vtos %v693
    %v696 = vperm.slane %v647, 0
    %v697 = vperm.slane %v647, 1
    %v700 = vsub.f32 %v626, %v696
    %v701 = vsub.f32 %v639, %v697
    %v702 = vand.u32 2147483647, %v700
    %v703 = vand.u32 2147483647, %v701
    %v705 = vperm.slane %v652, 0
    %v706 = vperm.slane %v652, 1
    %v709 = vsub.f32 %v626, %v705
    %v710 = vsub.f32 %v639, %v706
    %v711 = vand.u32 2147483647, %v709
    %v712 = vand.u32 2147483647, %v710
    %v715 = vrot.slane %v711, 1
    %v716 = vrot.slane %v712, 1
    %v719 = vadd.f32 %v702, %v715
    %v720 = vadd.f32 %v703, %v716
    %v721 = vmul.f32 %v719, %v661
    %v722 = vmul.f32 %v720, %v662
    %v723 = vsel %vm665, %v721, 0.0
    %v724 = vsel %vm665, %v722, 0.0
    %v725 = vadd.f32 %v723, %v724
    %726 = vadd.xlane.f32.xlu0 %v725
    %v727 = vpop.xlane.xlu0 %726
    %v728 = vrot.slane %v727, 4
    %v729 = vadd.f32 %v727, %v728
    %v730 = vrot.slane %v729, 2
    %v731 = vadd.f32 %v729, %v730
    %v732 = vrot.slane %v731, 1
    %v733 = vadd.f32 %v731, %v732
    %s734 = vtos %v733
    %s735 = smul.f32 %s734, %s694
    %v736 = vmul.f32 %v626, %v626
    %v737 = vmul.f32 %v639, %v639
    %v740 = vrot.slane %v736, 1
    %v741 = vrot.slane %v737, 1
    %v744 = vadd.f32 %v736, %v740
    %v745 = vadd.f32 %v737, %v741
    %v746 = vrot.slane %v736, 2
    %v747 = vrot.slane %v737, 2
    %v750 = vadd.f32 %v744, %v746
    %v751 = vadd.f32 %v745, %v747
    %v752 = vmul.f32 %v647, %v647
    %v753 = vmul.f32 %v652, %v652
    %v754 = vadd.f32 %v752, %v753
    %v755 = vmul.f32 %v657, %v657
    %v756 = vadd.f32 %v754, %v755
    %v757 = vmul.f32 %v626, %v696
    %v758 = vmul.f32 %v639, %v697
    %v759 = vmul.f32 %v626, %v705
    %v760 = vmul.f32 %v639, %v706
    %v763 = vrot.slane %v759, 1
    %v764 = vrot.slane %v760, 1
    %v767 = vadd.f32 %v757, %v763
    %v768 = vadd.f32 %v758, %v764
    %v770 = vperm.slane %v657, 0
    %v771 = vperm.slane %v657, 1
    %v774 = vmul.f32 %v626, %v770
    %v775 = vmul.f32 %v639, %v771
    %v778 = vrot.slane %v774, 2
    %v779 = vrot.slane %v775, 2
    %v782 = vadd.f32 %v767, %v778
    %v783 = vadd.f32 %v768, %v779
    %v784 = vsub.f32 0.0, %v782
    %v785 = vsub.f32 0.0, %v783
    %v786 = vadd.f32 %v750, 1e-16
    %v787 = vadd.f32 %v751, 1e-16
    %v788 = vrsqrt.pop %v786
    %v789 = vmul.f32 %v788, %v786
    %v790 = vmul.f32 %v789, %v788
    %v791 = vmul.f32 0.5, %v790
    %v792 = vsub.f32 1.5, %v791
    %v793 = vmul.f32 %v788, %v792
    %vm794 = vweird.f32 %v786
    %vm795 = vweird.f32 %v788
    %vm796 = vmor %vm794, %vm795
    %v797 = vsel %vm796, %v788, %v793
    %v798 = vrsqrt.pop %v787
    %v799 = vmul.f32 %v798, %v787
    %v800 = vmul.f32 %v799, %v798
    %v801 = vmul.f32 0.5, %v800
    %v802 = vsub.f32 1.5, %v801
    %v803 = vmul.f32 %v798, %v802
    %vm804 = vweird.f32 %v787
    %vm805 = vweird.f32 %v798
    %vm806 = vmor %vm804, %vm805
    %v807 = vsel %vm806, %v798, %v803
    %v808 = vmul.f32 %v784, %v797
    %v809 = vmul.f32 %v785, %v807
    %v810 = vadd.f32 %v756, 1e-16
    %v811 = vrsqrt.pop %v810
    %v812 = vmul.f32 %v811, %v810
    %v813 = vmul.f32 %v812, %v811
    %v814 = vmul.f32 0.5, %v813
    %v815 = vsub.f32 1.5, %v814
    %v816 = vmul.f32 %v811, %v815
    %vm817 = vweird.f32 %v810
    %vm818 = vweird.f32 %v811
    %vm819 = vmor %vm817, %vm818
    %v820 = vsel %vm819, %v811, %v816
    %v822 = vperm.slane %v820, 0
    %v823 = vperm.slane %v820, 1
    %v826 = vmul.f32 %v808, %v822
    %v827 = vmul.f32 %v809, %v823
    %v828 = vmul.f32 %v826, %v661
    %v829 = vmul.f32 %v827, %v662
    %v830 = vsel %vm665, %v828, 0.0
    %v831 = vsel %vm665, %v829, 0.0
    %v832 = vadd.f32 %v830, %v831
    %833 = vadd.xlane.f32.xlu0 %v832
    %v834 = vpop.xlane.xlu0 %833
    %v835 = vrot.slane %v834, 4
    %v836 = vadd.f32 %v834, %v835
    %v837 = vrot.slane %v836, 2
    %v838 = vadd.f32 %v836, %v837
    %v839 = vrot.slane %v838, 1
    %v840 = vadd.f32 %v838, %v839
    %s841 = vtos %v840
    %s842 = smul.f32 %s841, %s694
    %s843 = sadd.f32 %s735, %s842
    %s844 = scalar_lea.smem [#allocation5], 0
    %845 = sst [smem:[%s844]] %s843
    %s846 = scalar_lea.smem [#allocation5], 1
    %847 = sst [smem:[%s846]] %s735
    %s848 = scalar_lea.smem [#allocation5], 2
    %849 = sst [smem:[%s848]] %s842
    // Predicated region
    $region26: #{tpu_custom_call.1} parent=1 // pred_check
      _
    $region27: #{tpu_custom_call.1} parent=1 // pred_check_branch
      %851 = sbr.rel (0) target = $region29
    $region28: #{tpu_custom_call.1} parent=1 // pred_region
      %853 = vsyncadd [#allocation3], 0
      %s855 = sshll.u32 [#allocation2], 4
      %s856 = int_to_ptr.vmem [resolvable:$true] %s855
      %s857 = sshll.u32 %s6, 4
      %s858 = int_to_ptr.hbm [resolvable:$true] %s857
      %860 = dma.vmem_to_hbm [thread:$0]  %s856, 256, %s858, [#allocation3]
    $region29: #{tpu_custom_call.1} parent=1 // pred_fallthru
      _
    // Predicated region
    $region30: #{tpu_custom_call.1} parent=1 // pred_check
      _
    $region31: #{tpu_custom_call.1} parent=1 // pred_check_branch
      %862 = sbr.rel (0) target = $region33
    $region32: #{tpu_custom_call.1} parent=1 // pred_region
      %864 = vsyncadd [#allocation4], 0
      %s866 = sshll.u32 %s7, 4
      %s867 = int_to_ptr.hbm [resolvable:$true] %s866
      %869 = dma.smem_to_hbm [#allocation5], 16, %s867, [#allocation4]
    $region33: #{tpu_custom_call.1} parent=1 // pred_fallthru
      _
    // Predicated region
    $region34: #{tpu_custom_call.1} parent=1 // pred_check
      _
    $region35: #{tpu_custom_call.1} parent=1 // pred_check_branch
      %871 = sbr.rel (0) target = $region37
    $region36: #{tpu_custom_call.1} parent=1 // pred_region
      %873 = dma.done [#allocation3], 256
    $region37: #{tpu_custom_call.1} parent=1 // pred_fallthru
      _
    // Predicated region
    $region38: #{tpu_custom_call.1} parent=1 // pred_check
      _
    $region39: #{tpu_custom_call.1} parent=1 // pred_check_branch
      %875 = sbr.rel (0) target = $region41
    $region40: #{tpu_custom_call.1} parent=1 // pred_region
      %877 = dma.done [#allocation4], 16
    $region41: #{tpu_custom_call.1} parent=1 // pred_fallthru
      _
    %878 = sfence
    %879 = vsyncpa [#allocation3], 1
    %880 = vsyncpa [#allocation4], 1

</llo_original>
